<compile_context>
chip_gen: v7x
topology: tpu7x:2x2x1
jax: 0.10.0
libtpu: 0.0.40
codegen_flags: <defaults>
</compile_context>

<pallas_src>
import functools
import math

import numpy as np
import jax
import jax.numpy as jnp
from jax.experimental import pallas as pl
from jax.experimental.pallas import tpu as pltpu

A = 0.7071067811865476               # Haar coefficient (== torch buffer `wavelets`)
_LANE = 128                          # TPU lane width
_MAX_BLOCK_BYTES = 2 * 1024 * 1024   # per in/out block; x2 (in+out) x2 (dbl-buffer) ~ 8 MiB
_VMEM_LIMIT = 32 * 1024 * 1024       # safe on v5e/v6e (128 MiB phys) and v7x (64 MiB phys)


# ----------------------------- Pallas kernels ------------------------------

def _idwt2d_kernel(x_ref, o_ref, *, scale):
    # x_ref / o_ref: [1, 4, R, L_TILE]; sub-band order ll, lh, hl, hh.
    # Output index d = 2*di + dj (di: H offset, dj: W offset).
    f32 = jnp.float32
    xll = x_ref[0, 0].astype(f32) * scale
    xlh = x_ref[0, 1].astype(f32) * scale
    xhl = x_ref[0, 2].astype(f32) * scale
    xhh = x_ref[0, 3].astype(f32) * scale
    # 2-stage Walsh butterfly (8 add/sub instead of 12).
    a0 = xll + xlh
    a1 = xll - xlh
    a2 = xhl + xhh
    a3 = xhl - xhh
    odt = o_ref.dtype
    o_ref[0, 0] = (a0 + a2).astype(odt)   # di=0 dj=0
    o_ref[0, 1] = (a0 - a2).astype(odt)   # di=0 dj=1
    o_ref[0, 2] = (a1 + a3).astype(odt)   # di=1 dj=0
    o_ref[0, 3] = (a1 - a3).astype(odt)   # di=1 dj=1


def _idwt3d_kernel(x_ref, o_ref, *, scale):
    # x_ref / o_ref: [1, 8, R, L_TILE]; sub-band order lll..hhh (chunk order).
    # Output index d = 4*dt + 2*di + dj ; coefficient of sub-band s is
    # (-1)^popcount(d & s) (Walsh-Hadamard).  Computed as a 3-stage butterfly:
    # 24 add/sub, scale folded once into the loads, f32 accumulation.
    f32 = jnp.float32
    x = [x_ref[0, s].astype(f32) * scale for s in range(8)]
    # stage 1: pairs (s, s^1)  -- W-sign
    a = [None] * 8
    for b in range(0, 8, 2):
        a[b] = x[b] + x[b + 1]
        a[b + 1] = x[b] - x[b + 1]
    # stage 2: pairs (s, s^2)  -- H-sign
    c = [None] * 8
    for hi in (0, 4):
        for lo in (0, 1):
            c[hi + lo] = a[hi + lo] + a[hi + 2 + lo]
            c[hi + 2 + lo] = a[hi + lo] - a[hi + 2 + lo]
    # stage 3: pairs (s, s^4)  -- T-sign
    odt = o_ref.dtype
    for i in range(4):
        o_ref[0, i] = (c[i] + c[4 + i]).astype(odt)
        o_ref[0, 4 + i] = (c[i] - c[4 + i]).astype(odt)


# ------------------------------ tiling helpers ------------------------------

def _choose_fold(g, S):
    """Choose (R, L): keep g on sublanes unless folding it into the lane axis
    is what makes the lane dimension 128-aligned."""
    if S % _LANE != 0 and (g * S) % _LANE == 0:
        return 1, g * S
    return g, S


def _pick_lane_tile(L, row_bytes):
    """Largest lane tile (multiple of 128, dividing L, <= 8192, within the
    per-block byte budget); prefer >= 4 pipeline steps when tiles stay >= 512
    lanes.  Falls back to the full (possibly unaligned) L for tiny inputs."""
    if L % _LANE != 0:
        return L
    divisors = [t for t in range(_LANE, min(L, 8192) + 1, _LANE) if L % t == 0]
    fitting = [t for t in divisors if t * row_bytes <= _MAX_BLOCK_BYTES] or [_LANE]
    pipelined = [t for t in fitting if (L // t) >= 4 and t >= 512]
    pool = pipelined or fitting
    return max(pool)


def _run_idwt(x_flat, kernel, n_sub, R, L, scale):
    """x_flat: [B, n_sub, R, L] in the native channel order."""
    B = x_flat.shape[0]
    row_bytes = n_sub * R * x_flat.dtype.itemsize
    L_T = _pick_lane_tile(L, row_bytes)
    grid = (B, L // L_T)
    return pl.pallas_call(
        functools.partial(kernel, scale=scale),
        out_shape=jax.ShapeDtypeStruct((B, n_sub, R, L), x_flat.dtype),
        grid=grid,
        in_specs=[pl.BlockSpec((1, n_sub, R, L_T), lambda b, si: (b, 0, 0, si))],
        out_specs=pl.BlockSpec((1, n_sub, R, L_T), lambda b, si: (b, 0, 0, si)),
        compiler_params=pltpu.CompilerParams(
            dimension_semantics=("parallel", "parallel"),
            vmem_limit_bytes=_VMEM_LIMIT),
    )(x_flat)


# ------------------------------- wrappers -----------------------------------

def idwt2d(x, rescale=True):
    """x: [B, 4*g, 1, H, W]  ->  [B, g, 2H, 2W]"""
    B, C, D, H, W = x.shape
    assert D == 1 and C % 4 == 0
    g = C // 4
    scale = A * A
    if rescale:
        scale = scale / 2.0
    S = H * W
    R, L = _choose_fold(g, S)
    x4 = x.reshape(B, 4, R, L)                    # free reshape (native order)

    out = _run_idwt(x4, _idwt2d_kernel, 4, R, L, scale)

    # d = 2*di + dj on axis 1; single fused XLA transpose does the interleave.
    out = out.reshape(B, 2, 2, g, H, W)           # [B, di, dj, g, H, W]
    y = jnp.transpose(out, (0, 3, 4, 1, 5, 2))    # [B, g, H, di, W, dj]
    return y.reshape(B, g, 2 * H, 2 * W)


def idwt3d(x, rescale=True):
    """x: [B, 8*g, T, H, W]  ->  [B, g, 2T, 2H, 2W]"""
    B, C, T, H, W = x.shape
    assert C % 8 == 0
    g = C // 8
    scale = A * A * A
    if rescale:
        scale = scale / (2.0 * math.sqrt(2.0))
    S = T * H * W
    R, L = _choose_fold(g, S)
    x8 = x.reshape(B, 8, R, L)                    # free reshape (native order)

    out = _run_idwt(x8, _idwt3d_kernel, 8, R, L, scale)

    # d = 4*dt + 2*di + dj on axis 1; single fused XLA transpose interleaves.
    out = out.reshape(B, 2, 2, 2, g, T, H, W)          # [B, dt, di, dj, g, T, H, W]
    y = jnp.transpose(out, (0, 4, 5, 1, 6, 2, 7, 3))   # [B, g, T, dt, H, di, W, dj]
    return y.reshape(B, g, 2 * T, 2 * H, 2 * W)


def unpatcher_forward(xi, xv, rescale=True):
    """Mirror of UnPatcher.forward for x = (xi, xv)."""
    if xi is not None and xv is not None:
        yi = idwt2d(xi, rescale=rescale)
        yv = idwt3d(xv, rescale=rescale)
        return jnp.concatenate([yi[:, :, None], yv], axis=2)
    elif xv is None and xi is not None:
        return idwt2d(xi, rescale=rescale)
    elif xv is not None and xi is None:
        return idwt3d(xv, rescale=rescale)


# --------------------------- numpy reference --------------------------------
# Direct transcription of the torch conv_transpose semantics (stride 2,
# kernel length 2, padding 0) for verification.

def _upsample_np(x, k, axis):
    shape = list(x.shape)
    shape[axis] *= 2
    out = np.zeros(shape, dtype=x.dtype)
    sl0 = [slice(None)] * x.ndim
    sl1 = [slice(None)] * x.ndim
    sl0[axis] = slice(0, None, 2)
    sl1[axis] = slice(1, None, 2)
    out[tuple(sl0)] = k[0] * x
    out[tuple(sl1)] = k[1] * x
    return out


def _ref_2didwt(x, rescale):
    x = np.asarray(x)[:, :, 0]  # squeeze T
    hl = np.array([A, A], dtype=x.dtype)
    hh = np.array([A, -A], dtype=x.dtype)
    xll, xlh, xhl, xhh = np.split(x, 4, axis=1)
    yl = _upsample_np(xll, hl, 2) + _upsample_np(xlh, hh, 2)
    yh = _upsample_np(xhl, hl, 2) + _upsample_np(xhh, hh, 2)
    y = _upsample_np(yl, hl, 3) + _upsample_np(yh, hh, 3)
    if rescale:
        y = y / 2.0
    return y


def _ref_3didwt(x, rescale):
    x = np.asarray(x)
    hl = np.array([A, A], dtype=x.dtype)
    hh = np.array([A, -A], dtype=x.dtype)
    xlll, xllh, xlhl, xlhh, xhll, xhlh, xhhl, xhhh = np.split(x, 8, axis=1)
    xll = _upsample_np(xlll, hl, 4) + _upsample_np(xllh, hh, 4)
    xlh = _upsample_np(xlhl, hl, 4) + _upsample_np(xlhh, hh, 4)
    xhl = _upsample_np(xhll, hl, 4) + _upsample_np(xhlh, hh, 4)
    xhh = _upsample_np(xhhl, hl, 4) + _upsample_np(xhhh, hh, 4)
    xl = _upsample_np(xll, hl, 3) + _upsample_np(xlh, hh, 3)
    xh = _upsample_np(xhl, hl, 3) + _upsample_np(xhh, hh, 3)
    y = _upsample_np(xl, hl, 2) + _upsample_np(xh, hh, 2)
    if rescale:
        y = y / (2.0 * np.sqrt(2.0))
    return y


def _ref_forward(xi, xv, rescale=True):
    yi = _ref_2didwt(xi, rescale)
    yv = _ref_3didwt(xv, rescale)
    return np.concatenate([yi[:, :, None], yv], axis=2)


# --------------------------------- main --------------------------------------

if __name__ == "__main__":
    key = jax.random.PRNGKey(0)
    k1, k2, k3, k4 = jax.random.split(key, 4)

    # Small shapes consistent with the module (test path, single lane tile).
    B, g, T, H, W = 2, 4, 4, 8, 8
    xi = jax.random.normal(k1, (B, 4 * g, 1, H, W), dtype=jnp.float32)
    xv = jax.random.normal(k2, (B, 8 * g, T, H, W), dtype=jnp.float32)

    y = jax.block_until_ready(unpatcher_forward(xi, xv, rescale=True))
    assert y.shape == (B, g, 2 * T + 1, 2 * H, 2 * W), y.shape
    y_ref = _ref_forward(np.asarray(xi), np.asarray(xv), rescale=True)
    np.testing.assert_allclose(np.asarray(y), y_ref, rtol=1e-5, atol=1e-5)

    # Lane-aligned shape that exercises the multi-tile pipelined path.
    B2, g2, T2, H2, W2 = 1, 4, 4, 16, 32
    xi2 = jax.random.normal(k3, (B2, 4 * g2, 1, H2, W2), dtype=jnp.float32)
    xv2 = jax.random.normal(k4, (B2, 8 * g2, T2, H2, W2), dtype=jnp.float32)

    yi2 = jax.block_until_ready(idwt2d(xi2, rescale=True))
    yv2 = jax.block_until_ready(idwt3d(xv2, rescale=True))
    np.testing.assert_allclose(np.asarray(yi2), _ref_2didwt(np.asarray(xi2), True),
                               rtol=1e-5, atol=1e-5)
    np.testing.assert_allclose(np.asarray(yv2), _ref_3didwt(np.asarray(xv2), True),
                               rtol=1e-5, atol=1e-5)

    print("KERNEL_OK")
</pallas_src>

<mosaic_0001>
module attributes {stable_mosaic.version = 11 : i64} {
  func.func @_idwt2d_kernel(%arg0: i32, %arg1: i32, %arg2: memref<1x4x1x256xf32, #tpu.memory_space<vmem>>, %arg3: memref<1x4x1x256xf32, #tpu.memory_space<vmem>>) attributes {dimension_semantics = [#tpu.dimension_semantics<parallel>, #tpu.dimension_semantics<parallel>], iteration_bounds = array<i64: 2, 1>, scalar_prefetch = 0 : i64, scratch_operands = 0 : i64, tpu.core_type = #tpu.core_type<tc>, window_params = [{transform_indices = @transform_0, window_bounds = array<i64: 1, 4, 1, 256>}, {transform_indices = @transform_1, window_bounds = array<i64: 1, 4, 1, 256>}]} {
    %c0 = arith.constant 0 : index
    %c0_0 = arith.constant 0 : index
    %c0_1 = arith.constant 0 : index
    %c0_2 = arith.constant 0 : index
    %0 = vector.load %arg2[%c0, %c0_0, %c0_1, %c0_2] : memref<1x4x1x256xf32, #tpu.memory_space<vmem>>, vector<1x1x1x256xf32>
    %1 = vector.shape_cast %0 : vector<1x1x1x256xf32> to vector<1x256xf32>
    %cst = arith.constant 2.500000e-01 : f32
    %2 = vector.broadcast %cst : f32 to vector<1x256xf32>
    %3 = arith.mulf %1, %2 : vector<1x256xf32>
    %c0_3 = arith.constant 0 : index
    %c1 = arith.constant 1 : index
    %c0_4 = arith.constant 0 : index
    %c0_5 = arith.constant 0 : index
    %4 = vector.load %arg2[%c0_3, %c1, %c0_4, %c0_5] : memref<1x4x1x256xf32, #tpu.memory_space<vmem>>, vector<1x1x1x256xf32>
    %5 = vector.shape_cast %4 : vector<1x1x1x256xf32> to vector<1x256xf32>
    %cst_6 = arith.constant 2.500000e-01 : f32
    %6 = vector.broadcast %cst_6 : f32 to vector<1x256xf32>
    %7 = arith.mulf %5, %6 : vector<1x256xf32>
    %c0_7 = arith.constant 0 : index
    %c2 = arith.constant 2 : index
    %c0_8 = arith.constant 0 : index
    %c0_9 = arith.constant 0 : index
    %8 = vector.load %arg2[%c0_7, %c2, %c0_8, %c0_9] : memref<1x4x1x256xf32, #tpu.memory_space<vmem>>, vector<1x1x1x256xf32>
    %9 = vector.shape_cast %8 : vector<1x1x1x256xf32> to vector<1x256xf32>
    %cst_10 = arith.constant 2.500000e-01 : f32
    %10 = vector.broadcast %cst_10 : f32 to vector<1x256xf32>
    %11 = arith.mulf %9, %10 : vector<1x256xf32>
    %c0_11 = arith.constant 0 : index
    %c3 = arith.constant 3 : index
    %c0_12 = arith.constant 0 : index
    %c0_13 = arith.constant 0 : index
    %12 = vector.load %arg2[%c0_11, %c3, %c0_12, %c0_13] : memref<1x4x1x256xf32, #tpu.memory_space<vmem>>, vector<1x1x1x256xf32>
    %13 = vector.shape_cast %12 : vector<1x1x1x256xf32> to vector<1x256xf32>
    %cst_14 = arith.constant 2.500000e-01 : f32
    %14 = vector.broadcast %cst_14 : f32 to vector<1x256xf32>
    %15 = arith.mulf %13, %14 : vector<1x256xf32>
    %16 = arith.addf %3, %7 : vector<1x256xf32>
    %17 = arith.subf %3, %7 : vector<1x256xf32>
    %18 = arith.addf %11, %15 : vector<1x256xf32>
    %19 = arith.subf %11, %15 : vector<1x256xf32>
    %20 = arith.addf %16, %18 : vector<1x256xf32>
    %c0_15 = arith.constant 0 : index
    %c0_16 = arith.constant 0 : index
    %c0_17 = arith.constant 0 : index
    %c0_18 = arith.constant 0 : index
    %21 = vector.load %arg3[%c0_15, %c0_16, %c0_17, %c0_18] : memref<1x4x1x256xf32, #tpu.memory_space<vmem>>, vector<1x1x1x256xf32>
    %22 = vector.shape_cast %21 : vector<1x1x1x256xf32> to vector<1x256xf32>
    %23 = vector.shape_cast %20 : vector<1x256xf32> to vector<1x1x1x256xf32>
    tpu.vector_store %arg3[%c0_15, %c0_16, %c0_17, %c0_18], %23 {strides = array<i32>} : memref<1x4x1x256xf32, #tpu.memory_space<vmem>>, vector<1x1x1x256xf32>,
    %24 = arith.subf %16, %18 : vector<1x256xf32>
    %c0_19 = arith.constant 0 : index
    %c1_20 = arith.constant 1 : index
    %c0_21 = arith.constant 0 : index
    %c0_22 = arith.constant 0 : index
    %25 = vector.load %arg3[%c0_19, %c1_20, %c0_21, %c0_22] : memref<1x4x1x256xf32, #tpu.memory_space<vmem>>, vector<1x1x1x256xf32>
    %26 = vector.shape_cast %25 : vector<1x1x1x256xf32> to vector<1x256xf32>
    %27 = vector.shape_cast %24 : vector<1x256xf32> to vector<1x1x1x256xf32>
    tpu.vector_store %arg3[%c0_19, %c1_20, %c0_21, %c0_22], %27 {strides = array<i32>} : memref<1x4x1x256xf32, #tpu.memory_space<vmem>>, vector<1x1x1x256xf32>,
    %28 = arith.addf %17, %19 : vector<1x256xf32>
    %c0_23 = arith.constant 0 : index
    %c2_24 = arith.constant 2 : index
    %c0_25 = arith.constant 0 : index
    %c0_26 = arith.constant 0 : index
    %29 = vector.load %arg3[%c0_23, %c2_24, %c0_25, %c0_26] : memref<1x4x1x256xf32, #tpu.memory_space<vmem>>, vector<1x1x1x256xf32>
    %30 = vector.shape_cast %29 : vector<1x1x1x256xf32> to vector<1x256xf32>
    %31 = vector.shape_cast %28 : vector<1x256xf32> to vector<1x1x1x256xf32>
    tpu.vector_store %arg3[%c0_23, %c2_24, %c0_25, %c0_26], %31 {strides = array<i32>} : memref<1x4x1x256xf32, #tpu.memory_space<vmem>>, vector<1x1x1x256xf32>,
    %32 = arith.subf %17, %19 : vector<1x256xf32>
    %c0_27 = arith.constant 0 : index
    %c3_28 = arith.constant 3 : index
    %c0_29 = arith.constant 0 : index
    %c0_30 = arith.constant 0 : index
    %33 = vector.load %arg3[%c0_27, %c3_28, %c0_29, %c0_30] : memref<1x4x1x256xf32, #tpu.memory_space<vmem>>, vector<1x1x1x256xf32>
    %34 = vector.shape_cast %33 : vector<1x1x1x256xf32> to vector<1x256xf32>
    %35 = vector.shape_cast %32 : vector<1x256xf32> to vector<1x1x1x256xf32>
    tpu.vector_store %arg3[%c0_27, %c3_28, %c0_29, %c0_30], %35 {strides = array<i32>} : memref<1x4x1x256xf32, #tpu.memory_space<vmem>>, vector<1x1x1x256xf32>,
    return
  }
  func.func @transform_0(%arg0: i32, %arg1: i32) -> (i32, i32, i32, i32) {
    %c0_i32 = arith.constant 0 : i32
    %c0_i32_0 = arith.constant 0 : i32
    %c0_i32_1 = arith.constant 0 : i32
    return %arg0, %c0_i32, %c0_i32_0, %arg1 : i32, i32, i32, i32
  }
  func.func @transform_1(%arg0: i32, %arg1: i32) -> (i32, i32, i32, i32) {
    %c0_i32 = arith.constant 0 : i32
    %c0_i32_0 = arith.constant 0 : i32
    %c0_i32_1 = arith.constant 0 : i32
    return %arg0, %c0_i32, %c0_i32_0, %arg1 : i32, i32, i32, i32
  }
}

</mosaic_0001>

<llo_original>
// kernel: tpu_custom_call.1
$region0: #{tpu_custom_call.1}
  #allocation0 [shape = 'u32[]', space=smem, size = 0x4, offset = 0x4, fixed_abs, tag = 'smem constant byte address 0x4 - core index']
  #allocation1 [shape = 'u32[144,128]{1,0:T(1,128)}', space=vmem, size = 0x12000, scoped, tag = 'internal scratch']
  %s0 = inlined_call_operand.hbm [shape: f32[2,4,1,256], index: 0, kind: input, shape index: {}]
  %s1 = inlined_call_operand.hbm [shape: f32[2,4,1,256], index: 1, kind: output, shape index: {}]
  %s2 = sld [smem:[#allocation0]]
  $region41: #{tpu_custom_call.1} parent=0
    _
  %s4 = ssub.s32 1, %s2
  %s5 = scalar_select 0, %s4, %s2
  $region1: #{tpu_custom_call.1} parent=0
    #allocation2 [shape = 'u8[8192]{0}', space=vmem, size = 0x2000, scoped, tag = 'input window, operand 0']
    #allocation3 [shape = 's32[2]{0}', space=sflag, size = 0x8, scoped, tag = 'scoped memory for tpu_custom_call.1']
    #allocation4 [shape = 's32[2]{0}', space=sflag, size = 0x8, scoped, tag = 'scoped memory for tpu_custom_call.1']
    #allocation5 [shape = 'u8[8192]{0}', space=vmem, size = 0x2000, scoped, tag = 'output window, operand 0']
    %6 = vsyncpa [#allocation3], 0
    %s7 = scalar_lea.sflag [#allocation3], 1
    %8 = vsyncpa %s7, 0
    %9 = vsyncpa [#allocation4], 0
    %s10 = scalar_lea.sflag [#allocation4], 1
    %11 = vsyncpa %s10, 0
    loop: start=0, step=1, limit=4
    $region2: #{tpu_custom_call.1} parent=1 // loop_pre_header
      _
    $region3: #{tpu_custom_call.1} parent=1 // loop_header
      %s13 = sphi 0, %s17
      %p14 = scmp.ge.s32.totalorder %s13, 4
      %s20 = sphi 0, %s32
      %s21 = sphi 0, %s28
      %s22 = sphi 0, %s20
      %s23 = sphi 0, %s21
      %s24 = sphi 0, %s22
      %s25 = sphi 0, %s23
      %s37 = sphi 0, %s39
      %s40 = sphi 0, %s37
      %s41 = sphi 0, %s40
      %s57 = sphi 0, %s41
      %s65 = sphi 0, %s67
      %s68 = sphi 0, %s65
      %s69 = sphi 0, %s68
      %s85 = sphi 0, %s69
    $region4: #{tpu_custom_call.1} parent=1 // loop_header_branch
      %16 = sbr.rel (%p14) target = $region8
    $region5: #{tpu_custom_call.1} parent=1 // loop_body
      %s18 = ssub.s32 %s13, 1
      %s19 = ssub.s32 %s13, 2
      %s26 = sadd.s32 1, %s21
      %p27 = scmp.ge.s32.totalorder %s26, 1
      %s28 = scalar_select %p27, 0, %s26
      %s29 = sadd.s32 1, %s20
      %s30 = scalar_select %p27, %s29, %s20
      %p31 = scmp.ge.s32.totalorder %s30, 2
      %s32 = scalar_select %p31, 0, %s30
      %s33 = ssub.s32 %s20, %s32
      %s34 = ssub.s32 %s21, %s28
      %s35 = sor.u32 %s33, %s34
      %p36 = scmp.eq.s32.totalorder %s35, 0
      %s38 = sadd.s32 %s37, 1
      %s39 = scalar_select %p36, %s37, %s38
      %p42 = pneg %p36
      %p43 = scmp.eq.s32.totalorder %s13, 1
      %p44 = por %p42, %p43
      %p45 = scmp.ne.s32.totalorder %s37, %s40
      %p46 = scmp.eq.s32.totalorder %s13, 0
      %p47 = por %p45, %p46
      %p48 = scmp.ne.s32.totalorder %s37, %s40
      %p49 = scmp.eq.s32.totalorder %s18, 1
      %p50 = por %p48, %p49
      %p51 = scmp.ne.s32.totalorder %s40, %s41
      %p52 = scmp.eq.s32.totalorder %s18, 0
      %p53 = por %p51, %p52
      %p54 = scmp.ne.s32.totalorder %s40, %s41
      %p55 = scmp.eq.s32.totalorder %s19, 1
      %p56 = por %p54, %p55
      %p58 = scmp.ne.s32.totalorder %s41, %s57
      %p59 = scmp.eq.s32.totalorder %s19, 0
      %p60 = por %p58, %p59
      %s61 = ssub.s32 %s20, %s32
      %s62 = ssub.s32 %s21, %s28
      %s63 = sor.u32 %s61, %s62
      %p64 = scmp.eq.s32.totalorder %s63, 0
      %s66 = sadd.s32 %s65, 1
      %s67 = scalar_select %p64, %s65, %s66
      %p70 = pneg %p64
      %p71 = scmp.eq.s32.totalorder %s13, 1
      %p72 = por %p70, %p71
      %p73 = scmp.ne.s32.totalorder %s65, %s68
      %p74 = scmp.eq.s32.totalorder %s13, 0
      %p75 = por %p73, %p74
      %p76 = scmp.ne.s32.totalorder %s65, %s68
      %p77 = scmp.eq.s32.totalorder %s18, 1
      %p78 = por %p76, %p77
      %p79 = scmp.ne.s32.totalorder %s68, %s69
      %p80 = scmp.eq.s32.totalorder %s18, 0
      %p81 = por %p79, %p80
      %p82 = scmp.ne.s32.totalorder %s68, %s69
      %p83 = scmp.eq.s32.totalorder %s19, 1
      %p84 = por %p82, %p83
      %p86 = scmp.ne.s32.totalorder %s69, %s85
      %p87 = scmp.eq.s32.totalorder %s19, 0
      %p88 = por %p86, %p87
      %p89 = scmp.le.s32.totalorder 1, %s13
      %p90 = scmp.lt.s32.totalorder %s13, 3
      %p91 = pnand %p89, %p90
      %p92 = pneg %p91
      // Predicated region
      $region9: #{tpu_custom_call.1} parent=5 // pred_check
        _
      $region10: #{tpu_custom_call.1} parent=5 // pred_check_branch
        %94 = sbr.rel (%p91) target = $region12
      $region11: #{tpu_custom_call.1} parent=5 // pred_region
        %s95 = ssub.s32 %s13, 1
      $region12: #{tpu_custom_call.1} parent=5 // pred_fallthru
        _
      %p96 = scmp.lt.s32.totalorder %s13, 2
      // Predicated region
      $region13: #{tpu_custom_call.1} parent=5 // pred_check
        %p97 = pneg %p96
      $region14: #{tpu_custom_call.1} parent=5 // pred_check_branch
        %99 = sbr.rel (%p97) target = $region16
      $region15: #{tpu_custom_call.1} parent=5 // pred_region
        // Predicated region
        $region17: #{tpu_custom_call.1} parent=15 // pred_check
          %p100 = pneg %p47
        $region18: #{tpu_custom_call.1} parent=15 // pred_check_branch
          %102 = sbr.rel (%p100) target = $region20
        $region19: #{tpu_custom_call.1} parent=15 // pred_region
          %s103 = sand.u32 %s37, 1
          %s104 = scalar_lea.sflag [#allocation3], %s103
          %s105 = sand.u32 %s37, 1
          %s106 = smul.addr %s105, 8
          %s107 = scalar_lea.vmem [#allocation2], %s106
          %s108 = smul.u32 2, %s21
          %s110 = ssub.s32 128, 128
          %111 = vsyncadd %s104, %s110
          %s112 = smul.addr %s20, 8
          %s113 = sadd.s32 %s108, %s112
          %s114 = smul.addr %s113, 16
          %s115 = scalar_lea.hbm %s0, %s114
          %s116 = sshll.u32 %s107, 4
          %s117 = int_to_ptr.vmem [resolvable:$true] %s116
          %122 = dma.hbm_to_vmem [thread:$0]  %s115, 128, %s117, %s104, 32, 32, 2
        $region20: #{tpu_custom_call.1} parent=15 // pred_fallthru
          _
      $region16: #{tpu_custom_call.1} parent=5 // pred_fallthru
        _
      %p123 = scmp.le.s32.totalorder 1, %s13
      %p124 = scmp.lt.s32.totalorder %s13, 3
      %p125 = pnand %p123, %p124
      %p126 = pneg %p125
      // Predicated region
      $region21: #{tpu_custom_call.1} parent=5 // pred_check
        _
      $region22: #{tpu_custom_call.1} parent=5 // pred_check_branch
        %128 = sbr.rel (%p125) target = $region24
      $region23: #{tpu_custom_call.1} parent=5 // pred_region
        %s129 = ssub.s32 %s13, 1
        %s130 = sand.u32 %s40, 1
        %s131 = scalar_lea.sflag [#allocation3], %s130
        %s132 = sand.u32 %s40, 1
        %s133 = smul.addr %s132, 8
        %s134 = scalar_lea.vmem [#allocation2], %s133
        // Predicated region
        $region25: #{tpu_custom_call.1} parent=23 // pred_check
          %p135 = pneg %p53
        $region26: #{tpu_custom_call.1} parent=23 // pred_check_branch
          %137 = sbr.rel (%p135) target = $region28
        $region27: #{tpu_custom_call.1} parent=23 // pred_region
          %138 = dma.done %s131, 128
        $region28: #{tpu_custom_call.1} parent=23 // pred_fallthru
          _
        %s139 = sand.u32 %s40, 1
        %s140 = scalar_lea.sflag [#allocation3], %s139
        %s141 = sand.u32 %s40, 1
        %s142 = smul.addr %s141, 8
        %s143 = scalar_lea.vmem [#allocation2], %s142
        %p144 = pneg %p53
        %p145 = pneg %p50
        %p146 = pneg %p81
        %p147 = pneg %p78
        %s148 = sand.u32 %s68, 1
        %s149 = scalar_lea.sflag [#allocation4], %s148
        %s150 = sand.u32 %s68, 1
        %s151 = smul.addr %s150, 8
        %s152 = scalar_lea.vmem [#allocation5], %s151
        %s153 = smul.u32 2, %s23
        %s154 = smul.u32 2, %s23
        %v155 = vld [vmem:[%s134] sm:$0x3]
        %v156 = vmul.f32 %v155, 0.25
        %s157 = scalar_lea.vmem %s134, 2 [#allocation2]
        %v158 = vld [vmem:[%s157] sm:$0x3]
        %v159 = vmul.f32 %v158, 0.25
        %s160 = scalar_lea.vmem %s134, 4 [#allocation2]
        %v161 = vld [vmem:[%s160] sm:$0x3]
        %v162 = vmul.f32 %v161, 0.25
        %s163 = scalar_lea.vmem %s134, 6 [#allocation2]
        %v164 = vld [vmem:[%s163] sm:$0x3]
        %v165 = vmul.f32 %v164, 0.25
        %v166 = vadd.f32 %v156, %v159
        %v167 = vsub.f32 %v156, %v159
        %v168 = vadd.f32 %v162, %v165
        %v169 = vsub.f32 %v162, %v165
        %v170 = vadd.f32 %v166, %v168
        %v171 = vlaneseq
        %vm172 = vcmp.ge.s32.totalorder %v171, 0
        %vm173 = vcmp.lt.s32.totalorder %v171, 256
        %vm174 = vmand %vm172, %vm173
        %175 = vst.msk [vmem:[%s152] sm:$0x3] %vm174, %v170
        %v176 = vsub.f32 %v166, %v168
        %s177 = scalar_lea.vmem %s152, 2 [#allocation5]
        %178 = vst.msk [vmem:[%s177] sm:$0x3] %vm174, %v176
        %v179 = vadd.f32 %v167, %v169
        %s180 = scalar_lea.vmem %s152, 4 [#allocation5]
        %181 = vst.msk [vmem:[%s180] sm:$0x3] %vm174, %v179
        %v182 = vsub.f32 %v167, %v169
        %s183 = scalar_lea.vmem %s152, 6 [#allocation5]
        %184 = vst.msk [vmem:[%s183] sm:$0x3] %vm174, %v182
        %s185 = sand.u32 %s68, 1
        %s186 = scalar_lea.sflag [#allocation4], %s185
        %s187 = sand.u32 %s68, 1
        %s188 = smul.addr %s187, 8
        %s189 = scalar_lea.vmem [#allocation5], %s188
        // Predicated region
        $region29: #{tpu_custom_call.1} parent=23 // pred_check
          %p190 = pneg %p78
        $region30: #{tpu_custom_call.1} parent=23 // pred_check_branch
          %192 = sbr.rel (%p190) target = $region32
        $region31: #{tpu_custom_call.1} parent=23 // pred_region
          %s193 = smul.u32 2, %s23
          %s195 = ssub.s32 128, 128
          %196 = vsyncadd %s186, %s195
          %s197 = smul.addr %s22, 8
          %s198 = sadd.s32 %s193, %s197
          %s199 = smul.addr %s198, 16
          %s200 = scalar_lea.hbm %s1, %s199
          %s201 = sshll.u32 %s189, 4
          %s202 = int_to_ptr.vmem [resolvable:$true] %s201
          %207 = dma.vmem_to_hbm [thread:$0]  %s202, 128, %s200, %s186, 32, 32, 2
        $region32: #{tpu_custom_call.1} parent=23 // pred_fallthru
          _
      $region24: #{tpu_custom_call.1} parent=5 // pred_fallthru
        _
      %p208 = scmp.le.s32.totalorder 2, %s13
      // Predicated region
      $region33: #{tpu_custom_call.1} parent=5 // pred_check
        %p209 = pneg %p208
      $region34: #{tpu_custom_call.1} parent=5 // pred_check_branch
        %211 = sbr.rel (%p209) target = $region36
      $region35: #{tpu_custom_call.1} parent=5 // pred_region
        %s212 = ssub.s32 %s13, 2
        // Predicated region
        $region37: #{tpu_custom_call.1} parent=35 // pred_check
          %p213 = pneg %p84
        $region38: #{tpu_custom_call.1} parent=35 // pred_check_branch
          %215 = sbr.rel (%p213) target = $region40
        $region39: #{tpu_custom_call.1} parent=35 // pred_region
          %s216 = sand.u32 %s69, 1
          %s217 = scalar_lea.sflag [#allocation4], %s216
          %s218 = sand.u32 %s69, 1
          %s219 = smul.addr %s218, 8
          %s220 = scalar_lea.vmem [#allocation5], %s219
          %221 = dma.done %s217, 128
        $region40: #{tpu_custom_call.1} parent=35 // pred_fallthru
          _
      $region36: #{tpu_custom_call.1} parent=5 // pred_fallthru
        _
    $region6: #{tpu_custom_call.1} parent=1 // loop_footer
      %s17 = sadd.s32 1, %s13
    $region7: #{tpu_custom_call.1} parent=1 // loop_footer_branch
      %12 = sbr.rel target = $region3
    $region8: #{tpu_custom_call.1} parent=1 // loop_exit
      _
    %222 = vsyncpa [#allocation3], 1
    %s223 = scalar_lea.sflag [#allocation3], 1
    %224 = vsyncpa %s223, 1
    %225 = vsyncpa [#allocation4], 1
    %s226 = scalar_lea.sflag [#allocation4], 1
    %227 = vsyncpa %s226, 1

</llo_original>
